<compile_context>
chip_gen: v5e
topology: v5e:2x2
jax: 0.10.0
libtpu: 0.0.40
codegen_flags: <defaults>
</compile_context>

<pallas_src>
import jax
import jax.numpy as jnp
import numpy as np
from jax import lax
from jax.experimental import pallas as pl
from jax.experimental.pallas import tpu as pltpu


def _round_up(x, m):
    return (x + m - 1) // m * m


def lora_linear_kernel(x_ref, w_ref, b_ref, d_ref, bu_ref, o_ref, acc_ref):
    """Grid (i, j, k) over (M tiles, N tiles, K tiles); K is the reduction.

    x_ref  : (TM, TK)  compute dtype  activation tile
    w_ref  : (TN, TK)  compute dtype  orig Linear weight tile (PyTorch (out, in) layout)
    b_ref  : (1,  TN)  f32            bias tile
    d_ref  : (TM, RP)  compute dtype  precomputed LoRA down projection x @ A^T (rank padded)
    bu_ref : (TN, RP)  compute dtype  lora_up weight * (alpha/rank) (rank padded)
    acc_ref: (TM, TN)  f32            accumulator scratch
    """
    k = pl.program_id(2)
    nk = pl.num_programs(2)

    @pl.when(k == 0)
    def _():
        # Seed the accumulator with the bias: moves the (TM, TN) add off the
        # last (longest) K step.
        acc_ref[...] = jnp.broadcast_to(b_ref[...], acc_ref.shape)

    # Base path: x @ W^T by contracting the K (last) dims of both tiles; the
    # (N, K) weight is used as-is, never transposed in the wrapper.
    acc_ref[...] += lax.dot_general(
        x_ref[...], w_ref[...],
        dimension_numbers=(((1,), (1,)), ((), ())),
        preferred_element_type=jnp.float32)                     # (TM, TN)

    # Epilogue on the last K step: LoRA up matmul (scale already folded into
    # bu), single cast at the store.
    @pl.when(k == nk - 1)
    def _():
        up = lax.dot_general(
            d_ref[...], bu_ref[...],
            dimension_numbers=(((1,), (1,)), ((), ())),
            preferred_element_type=jnp.float32)                 # (TM, TN)
        o_ref[...] = (acc_ref[...] + up).astype(o_ref.dtype)


def lora_linear(x, w, b, lora_down_w, lora_up_w, alpha, rank, *,
                tm=512, tn=512, tk=1024, compute_dtype=jnp.bfloat16):
    """x: (..., K); w: (N, K); b: (N,); lora_down_w: (r, K); lora_up_w: (N, r)."""
    *lead, K = x.shape
    N = w.shape[0]
    r = lora_down_w.shape[0]
    M = int(np.prod(lead)) if lead else 1
    out_dtype = x.dtype
    scale = float(alpha) / float(rank)

    x2 = x.reshape(M, K).astype(compute_dtype)
    w_c = w.astype(compute_dtype)                                # (N, K), no transpose
    bias = b.astype(jnp.float32).reshape(1, N)

    # LoRA down projection hoisted out of the kernel: tiny (M, r) GEMM done by
    # XLA once; lets both M and N grid axes be megacore-parallel.
    d = lax.dot_general(x2, lora_down_w.astype(compute_dtype),
                        dimension_numbers=(((1,), (1,)), ((), ())),
                        preferred_element_type=jnp.float32)     # (M, r)

    # Fold alpha/rank into the tiny (N, r) up matrix (cheaper than scaling the
    # (TM, TN) output per tile).
    bu = (lora_up_w.astype(jnp.float32) * scale).astype(compute_dtype)   # (N, r)

    # Pad the rank dimension to a full lane width so LoRA-path loads are
    # lane-dense (the MXU pass cost is identical).
    r_pad = _round_up(max(r, 128), 128)

    # ---- tile selection + zero padding so every grid axis divides evenly ----
    tm = min(tm, _round_up(M, 8))
    M_pad = _round_up(M, tm)
    tn = min(tn, _round_up(N, 128))     # keep output lane-dense even for small N
    N_pad = _round_up(N, tn)
    tk = min(tk, _round_up(K, 128))
    K_pad = _round_up(K, tk)

    if M_pad != M or K_pad != K:
        x2 = jnp.pad(x2, ((0, M_pad - M), (0, K_pad - K)))
    if N_pad != N or K_pad != K:
        w_c = jnp.pad(w_c, ((0, N_pad - N), (0, K_pad - K)))
    if N_pad != N:
        bias = jnp.pad(bias, ((0, 0), (0, N_pad - N)))
    d = jnp.pad(d, ((0, M_pad - M), (0, r_pad - r))).astype(compute_dtype)
    bu = jnp.pad(bu, ((0, N_pad - N), (0, r_pad - r)))

    grid = (M_pad // tm, N_pad // tn, K_pad // tk)

    out = pl.pallas_call(
        lora_linear_kernel,
        out_shape=jax.ShapeDtypeStruct((M_pad, N_pad), out_dtype),
        grid_spec=pltpu.PrefetchScalarGridSpec(
            num_scalar_prefetch=0,
            grid=grid,
            in_specs=[
                pl.BlockSpec((tm, tk), lambda i, j, k: (i, k)),     # x tile
                pl.BlockSpec((tn, tk), lambda i, j, k: (j, k)),     # W tile (out, in)
                pl.BlockSpec((1, tn), lambda i, j, k: (0, j)),      # bias (f32)
                pl.BlockSpec((tm, r_pad), lambda i, j, k: (i, 0)),  # down proj
                pl.BlockSpec((tn, r_pad), lambda i, j, k: (j, 0)),  # lora_up * scale
            ],
            out_specs=pl.BlockSpec((tm, tn), lambda i, j, k: (i, j)),
            scratch_shapes=[
                pltpu.VMEM((tm, tn), jnp.float32),    # base accumulator
            ],
        ),
        compiler_params=pltpu.CompilerParams(
            # Both M and N are megacore-parallel (no cross-N carried state);
            # K is the accumulated reduction axis.
            dimension_semantics=("parallel", "parallel", "arbitrary"),
            vmem_limit_bytes=48 * 1024 * 1024,
        ),
    )(x2, w_c, bias, d, bu)

    return out[:M, :N].reshape(*lead, N)


if __name__ == "__main__":
    # Small shapes consistent with a Linear orig_module wrapped by LoRAModule.
    batch, seq = 2, 64
    in_features, out_features = 256, 256
    rank = 8
    alpha = 16.0

    key = jax.random.PRNGKey(0)
    kx, kw, kb, kd, ku = jax.random.split(key, 5)

    x = jax.random.normal(kx, (batch, seq, in_features), dtype=jnp.float32)

    # orig nn.Linear parameters (PyTorch layout: weight (out, in), bias (out,))
    w = jax.random.normal(kw, (out_features, in_features), dtype=jnp.float32) * 0.05
    b = jax.random.normal(kb, (out_features,), dtype=jnp.float32) * 0.05

    # LoRA params. Shapes from LoRAModule.create_layer(): lora_down (rank, in),
    # lora_up (out, rank). PyTorch zero-inits lora_up; use small random values
    # so the LoRA path is actually exercised.
    lora_down_w = jax.random.normal(kd, (rank, in_features), dtype=jnp.float32) * 0.05
    lora_up_w = jax.random.normal(ku, (out_features, rank), dtype=jnp.float32) * 0.05

    # Pure-JAX reference of the exact forward semantics.
    ref_base = jnp.einsum("bsk,nk->bsn", x, w) + b
    ref_lora = jnp.einsum("bsr,nr->bsn",
                          jnp.einsum("bsk,rk->bsr", x, lora_down_w),
                          lora_up_w)
    ref = ref_base + ref_lora * (alpha / rank)

    # 1) Default path: bf16 MXU operands, f32 accumulation, large tiles
    #    (single grid step at these small shapes). Loose tolerance vs the f32
    #    reference because operands are cast to bf16.
    out_bf16 = jax.block_until_ready(
        lora_linear(x, w, b, lora_down_w, lora_up_w, alpha, rank))
    np.testing.assert_allclose(np.asarray(out_bf16), np.asarray(ref),
                               rtol=3e-2, atol=3e-2)

    # 2) f32 compute path with small tiles: exercises the full (M, N, K) grid,
    #    the K accumulator init/finalize and the lane-padded LoRA path; tight
    #    tolerance against the f32 reference.
    out_f32 = jax.block_until_ready(
        lora_linear(x, w, b, lora_down_w, lora_up_w, alpha, rank,
                    tm=64, tn=128, tk=128, compute_dtype=jnp.float32))
    np.testing.assert_allclose(np.asarray(out_f32), np.asarray(ref),
                               rtol=1e-4, atol=1e-4)

    # TODO(synk): Conv2d orig_module variant (F.conv2d base + 1x1 lora_up conv) not implemented here.
    print("KERNEL_OK")
</pallas_src>

<mosaic_0001>
module attributes {stable_mosaic.version = 11 : i64} {
  func.func @lora_linear_kernel(%arg0: i32, %arg1: i32, %arg2: i32, %arg3: memref<128x256xbf16, #tpu.memory_space<vmem>>, %arg4: memref<256x256xbf16, #tpu.memory_space<vmem>>, %arg5: memref<1x256xf32, #tpu.memory_space<vmem>>, %arg6: memref<128x128xbf16, #tpu.memory_space<vmem>>, %arg7: memref<256x128xbf16, #tpu.memory_space<vmem>>, %arg8: memref<128x256xf32, #tpu.memory_space<vmem>>, %arg9: memref<128x256xf32, #tpu.memory_space<vmem>>) attributes {dimension_semantics = [#tpu.dimension_semantics<parallel>, #tpu.dimension_semantics<parallel>, #tpu.dimension_semantics<arbitrary>], iteration_bounds = array<i64: 1, 1, 1>, scalar_prefetch = 0 : i64, scratch_operands = 1 : i64, tpu.core_type = #tpu.core_type<tc>, window_params = [{transform_indices = @transform_0, window_bounds = array<i64: 128, 256>}, {transform_indices = @transform_1, window_bounds = array<i64: 256, 256>}, {transform_indices = @transform_2, window_bounds = array<i64: 1, 256>}, {transform_indices = @transform_3, window_bounds = array<i64: 128, 128>}, {transform_indices = @transform_4, window_bounds = array<i64: 256, 128>}, {transform_indices = @transform_5, window_bounds = array<i64: 128, 256>}]} {
    %c0_i32 = arith.constant 0 : i32
    %0 = arith.cmpi eq, %arg2, %c0_i32 : i32
    %1 = arith.extui %0 : i1 to i32
    %c0_i32_0 = arith.constant 0 : i32
    %2 = arith.cmpi ne, %1, %c0_i32_0 : i32
    scf.if %2 {
      %c0_10 = arith.constant 0 : index
      %c0_11 = arith.constant 0 : index
      %12 = vector.load %arg5[%c0_10, %c0_11] : memref<1x256xf32, #tpu.memory_space<vmem>>, vector<1x256xf32>
      %13 = vector.shape_cast %12 : vector<1x256xf32> to vector<1x256xf32>
      %14 = vector.broadcast %13 : vector<1x256xf32> to vector<128x256xf32>
      %c0_12 = arith.constant 0 : index
      %c0_13 = arith.constant 0 : index
      %15 = vector.load %arg9[%c0_12, %c0_13] : memref<128x256xf32, #tpu.memory_space<vmem>>, vector<128x256xf32>
      tpu.vector_store %arg9[%c0_12, %c0_13], %14 {strides = array<i32>} : memref<128x256xf32, #tpu.memory_space<vmem>>, vector<128x256xf32>,
    } else {
    }
    %c0 = arith.constant 0 : index
    %c0_1 = arith.constant 0 : index
    %3 = vector.load %arg9[%c0, %c0_1] : memref<128x256xf32, #tpu.memory_space<vmem>>, vector<128x256xf32>
    %c0_2 = arith.constant 0 : index
    %c0_3 = arith.constant 0 : index
    %4 = vector.load %arg3[%c0_2, %c0_3] : memref<128x256xbf16, #tpu.memory_space<vmem>>, vector<128x256xbf16>
    %c0_4 = arith.constant 0 : index
    %c0_5 = arith.constant 0 : index
    %5 = vector.load %arg4[%c0_4, %c0_5] : memref<256x256xbf16, #tpu.memory_space<vmem>>, vector<256x256xbf16>
    %cst = arith.constant dense<0.000000e+00> : vector<128x256xf32>
    %6 = tpu.matmul %4, %5, %cst {dimension_numbers = #tpu.dot_dimension_numbers<[1], [1], [0], [0], [0, 0, 1, 0], [], []>} : vector<128x256xbf16>, vector<256x256xbf16>, vector<128x256xf32> -> vector<128x256xf32>
    %7 = arith.addf %3, %6 : vector<128x256xf32>
    %c0_6 = arith.constant 0 : index
    %c0_7 = arith.constant 0 : index
    %8 = vector.load %arg9[%c0_6, %c0_7] : memref<128x256xf32, #tpu.memory_space<vmem>>, vector<128x256xf32>
    tpu.vector_store %arg9[%c0_6, %c0_7], %7 {strides = array<i32>} : memref<128x256xf32, #tpu.memory_space<vmem>>, vector<128x256xf32>,
    %c0_i32_8 = arith.constant 0 : i32
    %9 = arith.cmpi eq, %arg2, %c0_i32_8 : i32
    %10 = arith.extui %9 : i1 to i32
    %c0_i32_9 = arith.constant 0 : i32
    %11 = arith.cmpi ne, %10, %c0_i32_9 : i32
    scf.if %11 {
      %c0_10 = arith.constant 0 : index
      %c0_11 = arith.constant 0 : index
      %12 = vector.load %arg6[%c0_10, %c0_11] : memref<128x128xbf16, #tpu.memory_space<vmem>>, vector<128x128xbf16>
      %c0_12 = arith.constant 0 : index
      %c0_13 = arith.constant 0 : index
      %13 = vector.load %arg7[%c0_12, %c0_13] : memref<256x128xbf16, #tpu.memory_space<vmem>>, vector<256x128xbf16>
      %cst_14 = arith.constant dense<0.000000e+00> : vector<128x256xf32>
      %14 = tpu.matmul %12, %13, %cst_14 {dimension_numbers = #tpu.dot_dimension_numbers<[1], [1], [0], [0], [0, 0, 1, 0], [], []>} : vector<128x128xbf16>, vector<256x128xbf16>, vector<128x256xf32> -> vector<128x256xf32>
      %c0_15 = arith.constant 0 : index
      %c0_16 = arith.constant 0 : index
      %15 = vector.load %arg9[%c0_15, %c0_16] : memref<128x256xf32, #tpu.memory_space<vmem>>, vector<128x256xf32>
      %16 = arith.addf %15, %14 : vector<128x256xf32>
      %c0_17 = arith.constant 0 : index
      %c0_18 = arith.constant 0 : index
      %17 = vector.load %arg8[%c0_17, %c0_18] : memref<128x256xf32, #tpu.memory_space<vmem>>, vector<128x256xf32>
      tpu.vector_store %arg8[%c0_17, %c0_18], %16 {strides = array<i32>} : memref<128x256xf32, #tpu.memory_space<vmem>>, vector<128x256xf32>,
    } else {
    }
    return
  }
  func.func @transform_0(%arg0: i32, %arg1: i32, %arg2: i32) -> (i32, i32) {
    %c0_i32 = arith.constant 0 : i32
    return %arg0, %arg2 : i32, i32
  }
  func.func @transform_1(%arg0: i32, %arg1: i32, %arg2: i32) -> (i32, i32) {
    %c0_i32 = arith.constant 0 : i32
    return %arg1, %arg2 : i32, i32
  }
  func.func @transform_2(%arg0: i32, %arg1: i32, %arg2: i32) -> (i32, i32) {
    %c0_i32 = arith.constant 0 : i32
    %c0_i32_0 = arith.constant 0 : i32
    return %c0_i32, %arg1 : i32, i32
  }
  func.func @transform_3(%arg0: i32, %arg1: i32, %arg2: i32) -> (i32, i32) {
    %c0_i32 = arith.constant 0 : i32
    %c0_i32_0 = arith.constant 0 : i32
    return %arg0, %c0_i32 : i32, i32
  }
  func.func @transform_4(%arg0: i32, %arg1: i32, %arg2: i32) -> (i32, i32) {
    %c0_i32 = arith.constant 0 : i32
    %c0_i32_0 = arith.constant 0 : i32
    return %arg1, %c0_i32 : i32, i32
  }
  func.func @transform_5(%arg0: i32, %arg1: i32, %arg2: i32) -> (i32, i32) {
    %c0_i32 = arith.constant 0 : i32
    return %arg0, %arg1 : i32, i32
  }
}

</mosaic_0001>

<llo_original>
// kernel: tpu_custom_call.1
$region0: #{tpu_custom_call.1}
  #allocation0 [shape = 'u32[]', space=smem, size = 0x4, offset = 0x4, fixed_abs, tag = 'smem constant byte address 0x4 - core index']
  #allocation1 [shape = 'u32[72,128]{1,0:T(1,128)}', space=vmem, size = 0x9000, scoped, tag = 'internal scratch']
  #allocation2 [shape = 'f32[128,256]{1,0:T(8,128)}', space=vmem, size = 0x20000, scoped, tag = 'scratch operand']
  %s0 = inlined_call_operand.hbm [shape: bf16[128,256], index: 0, kind: input, shape index: {}]
  %s1 = inlined_call_operand.hbm [shape: bf16[256,256], index: 1, kind: input, shape index: {}]
  %s2 = inlined_call_operand.hbm [shape: f32[1,256], index: 2, kind: input, shape index: {}]
  %s3 = inlined_call_operand.hbm [shape: bf16[128,128], index: 3, kind: input, shape index: {}]
  %s4 = inlined_call_operand.hbm [shape: bf16[256,128], index: 4, kind: input, shape index: {}]
  %s5 = inlined_call_operand.hbm [shape: f32[128,256], index: 5, kind: output, shape index: {}]
  %s6 = sld [smem:[#allocation0]]
  $region58: #{tpu_custom_call.1} parent=0
    _
  %s8 = ssub.s32 1, %s6
  %s9 = scalar_select 0, %s8, %s6
  $region1: #{tpu_custom_call.1} parent=0
    #allocation3 [shape = 'u8[65536]{0}', space=vmem, size = 0x10000, scoped, tag = 'input window, operand 0, single buffered']
    #allocation4 [shape = 's32[1]{0}', space=sflag, size = 0x4, scoped, tag = 'scoped memory for tpu_custom_call.1']
    #allocation5 [shape = 's32[1]{0}', space=sflag, size = 0x4, scoped, tag = 'scoped memory for tpu_custom_call.1']
    #allocation6 [shape = 'u8[131072]{0}', space=vmem, size = 0x20000, scoped, tag = 'input window, operand 1, single buffered']
    #allocation7 [shape = 's32[1]{0}', space=sflag, size = 0x4, scoped, tag = 'scoped memory for tpu_custom_call.1']
    #allocation8 [shape = 'u8[1024]{0}', space=vmem, size = 0x400, scoped, tag = 'input window, operand 2, single buffered']
    #allocation9 [shape = 'u8[32768]{0}', space=vmem, size = 0x8000, scoped, tag = 'input window, operand 3, single buffered']
    #allocation10 [shape = 's32[1]{0}', space=sflag, size = 0x4, scoped, tag = 'scoped memory for tpu_custom_call.1']
    #allocation11 [shape = 'u8[65536]{0}', space=vmem, size = 0x10000, scoped, tag = 'input window, operand 4, single buffered']
    #allocation12 [shape = 'u8[131072]{0}', space=vmem, size = 0x20000, scoped, tag = 'output window, operand 0, single buffered']
    %10 = vsyncpa [#allocation4], 0
    %11 = vsyncpa [#allocation7], 0
    %12 = vsyncpa [#allocation10], 0
    %13 = vsyncpa [#allocation5], 0
    // Predicated region
    $region2: #{tpu_custom_call.1} parent=1 // pred_check
      _
    $region3: #{tpu_custom_call.1} parent=1 // pred_check_branch
      %15 = sbr.rel (0) target = $region5
    $region4: #{tpu_custom_call.1} parent=1 // pred_region
      %17 = vsyncadd [#allocation4], 0
      %s18 = sshll.u32 %s0, 4
      %s19 = int_to_ptr.hbm [resolvable:$true] %s18
      %s20 = sshll.u32 [#allocation3], 4
      %s21 = int_to_ptr.vmem [resolvable:$true] %s20
      %26 = dma.hbm_to_vmem [thread:$0]  %s19, 2048, %s21, [#allocation4], 128, 128, 8
    $region5: #{tpu_custom_call.1} parent=1 // pred_fallthru
      _
    // Predicated region
    $region6: #{tpu_custom_call.1} parent=1 // pred_check
      _
    $region7: #{tpu_custom_call.1} parent=1 // pred_check_branch
      %28 = sbr.rel (0) target = $region9
    $region8: #{tpu_custom_call.1} parent=1 // pred_region
      %30 = vsyncadd [#allocation7], 0
      %s31 = sshll.u32 %s1, 4
      %s32 = int_to_ptr.hbm [resolvable:$true] %s31
      %s33 = sshll.u32 [#allocation6], 4
      %s34 = int_to_ptr.vmem [resolvable:$true] %s33
      %39 = dma.hbm_to_vmem [thread:$0]  %s32, 4096, %s34, [#allocation7], 128, 128, 8
    $region9: #{tpu_custom_call.1} parent=1 // pred_fallthru
      _
    // Predicated region
    $region10: #{tpu_custom_call.1} parent=1 // pred_check
      _
    $region11: #{tpu_custom_call.1} parent=1 // pred_check_branch
      %41 = sbr.rel (0) target = $region13
    $region12: #{tpu_custom_call.1} parent=1 // pred_region
      %43 = vsyncadd [#allocation7], 0
      %s45 = sshll.u32 %s2, 4
      %s46 = int_to_ptr.hbm [resolvable:$true] %s45
      %s47 = sshll.u32 [#allocation8], 4
      %s48 = int_to_ptr.vmem [resolvable:$true] %s47
      %50 = dma.hbm_to_vmem [thread:$0]  %s46, 32, %s48, [#allocation7]
    $region13: #{tpu_custom_call.1} parent=1 // pred_fallthru
      _
    // Predicated region
    $region14: #{tpu_custom_call.1} parent=1 // pred_check
      _
    $region15: #{tpu_custom_call.1} parent=1 // pred_check_branch
      %52 = sbr.rel (0) target = $region17
    $region16: #{tpu_custom_call.1} parent=1 // pred_region
      %54 = vsyncadd [#allocation10], 0
      %s55 = sshll.u32 %s3, 4
      %s56 = int_to_ptr.hbm [resolvable:$true] %s55
      %s57 = sshll.u32 [#allocation9], 4
      %s58 = int_to_ptr.vmem [resolvable:$true] %s57
      %63 = dma.hbm_to_vmem [thread:$0]  %s56, 1024, %s58, [#allocation10], 64, 64, 4
    $region17: #{tpu_custom_call.1} parent=1 // pred_fallthru
      _
    // Predicated region
    $region18: #{tpu_custom_call.1} parent=1 // pred_check
      _
    $region19: #{tpu_custom_call.1} parent=1 // pred_check_branch
      %65 = sbr.rel (0) target = $region21
    $region20: #{tpu_custom_call.1} parent=1 // pred_region
      %67 = vsyncadd [#allocation10], 0
      %s68 = sshll.u32 %s4, 4
      %s69 = int_to_ptr.hbm [resolvable:$true] %s68
      %s70 = sshll.u32 [#allocation11], 4
      %s71 = int_to_ptr.vmem [resolvable:$true] %s70
      %76 = dma.hbm_to_vmem [thread:$0]  %s69, 2048, %s71, [#allocation10], 64, 64, 4
    $region21: #{tpu_custom_call.1} parent=1 // pred_fallthru
      _
    // Predicated region
    $region22: #{tpu_custom_call.1} parent=1 // pred_check
      _
    $region23: #{tpu_custom_call.1} parent=1 // pred_check_branch
      %78 = sbr.rel (0) target = $region25
    $region24: #{tpu_custom_call.1} parent=1 // pred_region
      %80 = dma.done [#allocation4], 2048
    $region25: #{tpu_custom_call.1} parent=1 // pred_fallthru
      _
    // Predicated region
    $region26: #{tpu_custom_call.1} parent=1 // pred_check
      _
    $region27: #{tpu_custom_call.1} parent=1 // pred_check_branch
      %82 = sbr.rel (0) target = $region29
    $region28: #{tpu_custom_call.1} parent=1 // pred_region
      %84 = dma.done [#allocation7], 4096
    $region29: #{tpu_custom_call.1} parent=1 // pred_fallthru
      _
    // Predicated region
    $region30: #{tpu_custom_call.1} parent=1 // pred_check
      _
    $region31: #{tpu_custom_call.1} parent=1 // pred_check_branch
      %86 = sbr.rel (0) target = $region33
    $region32: #{tpu_custom_call.1} parent=1 // pred_region
      %88 = dma.done [#allocation7], 32
    $region33: #{tpu_custom_call.1} parent=1 // pred_fallthru
      _
    // Predicated region
    $region34: #{tpu_custom_call.1} parent=1 // pred_check
      _
    $region35: #{tpu_custom_call.1} parent=1 // pred_check_branch
      %90 = sbr.rel (0) target = $region37
    $region36: #{tpu_custom_call.1} parent=1 // pred_region
      %92 = dma.done [#allocation10], 1024
    $region37: #{tpu_custom_call.1} parent=1 // pred_fallthru
      _
    // Predicated region
    $region38: #{tpu_custom_call.1} parent=1 // pred_check
      _
    $region39: #{tpu_custom_call.1} parent=1 // pred_check_branch
      %94 = sbr.rel (0) target = $region41
    $region40: #{tpu_custom_call.1} parent=1 // pred_region
      %96 = dma.done [#allocation10], 2048
    $region41: #{tpu_custom_call.1} parent=1 // pred_fallthru
      _
    %p97 = scmp.eq.s32.totalorder 0, 0
    // Predicated region
    $region42: #{tpu_custom_call.1} parent=1 // pred_check
      %p98 = pneg %p97
    $region43: #{tpu_custom_call.1} parent=1 // pred_check_branch
      %100 = sbr.rel (%p98) target = $region45
    $region44: #{tpu_custom_call.1} parent=1 // pred_region
      %v101 = vld [vmem:[#allocation8] sm:$0x3]
      %v103 = vperm.slane %v101, 0
      %v104 = vperm.slane %v101, 1
      %107 = vst [vmem:[#allocation2] sm:$0xff] %v103
      %108 = vst [vmem:[#allocation2 + $0x8] sm:$0xff] %v104
      %109 = vst [vmem:[#allocation2 + $0x10] sm:$0xff] %v103
      %110 = vst [vmem:[#allocation2 + $0x18] sm:$0xff] %v104
      %111 = vst [vmem:[#allocation2 + $0x20] sm:$0xff] %v103
      %112 = vst [vmem:[#allocation2 + $0x28] sm:$0xff] %v104
      %113 = vst [vmem:[#allocation2 + $0x30] sm:$0xff] %v103
      %114 = vst [vmem:[#allocation2 + $0x38] sm:$0xff] %v104
      %115 = vst [vmem:[#allocation2 + $0x40] sm:$0xff] %v103
      %116 = vst [vmem:[#allocation2 + $0x48] sm:$0xff] %v104
      %117 = vst [vmem:[#allocation2 + $0x50] sm:$0xff] %v103
      %118 = vst [vmem:[#allocation2 + $0x58] sm:$0xff] %v104
      %119 = vst [vmem:[#allocation2 + $0x60] sm:$0xff] %v103
      %120 = vst [vmem:[#allocation2 + $0x68] sm:$0xff] %v104
      %121 = vst [vmem:[#allocation2 + $0x70] sm:$0xff] %v103
      %122 = vst [vmem:[#allocation2 + $0x78] sm:$0xff] %v104
      %123 = vst [vmem:[#allocation2 + $0x80] sm:$0xff] %v103
      %124 = vst [vmem:[#allocation2 + $0x88] sm:$0xff] %v104
      %125 = vst [vmem:[#allocation2 + $0x90] sm:$0xff] %v103
      %126 = vst [vmem:[#allocation2 + $0x98] sm:$0xff] %v104
      %127 = vst [vmem:[#allocation2 + $0xa0] sm:$0xff] %v103
      %128 = vst [vmem:[#allocation2 + $0xa8] sm:$0xff] %v104
      %129 = vst [vmem:[#allocation2 + $0xb0] sm:$0xff] %v103
      %130 = vst [vmem:[#allocation2 + $0xb8] sm:$0xff] %v104
      %131 = vst [vmem:[#allocation2 + $0xc0] sm:$0xff] %v103
      %132 = vst [vmem:[#allocation2 + $0xc8] sm:$0xff] %v104
      %133 = vst [vmem:[#allocation2 + $0xd0] sm:$0xff] %v103
      %134 = vst [vmem:[#allocation2 + $0xd8] sm:$0xff] %v104
      %135 = vst [vmem:[#allocation2 + $0xe0] sm:$0xff] %v103
      %136 = vst [vmem:[#allocation2 + $0xe8] sm:$0xff] %v104
      %137 = vst [vmem:[#allocation2 + $0xf0] sm:$0xff] %v103
      %138 = vst [vmem:[#allocation2 + $0xf8] sm:$0xff] %v104
    $region45: #{tpu_custom_call.1} parent=1 // pred_fallthru
      _
    %v139 = vld [vmem:[#allocation2] sm:$0xff]
    %v140 = vld [vmem:[#allocation2 + $0x8] sm:$0xff]
    %v141 = vld [vmem:[#allocation2 + $0x10] sm:$0xff]
    %v142 = vld [vmem:[#allocation2 + $0x18] sm:$0xff]
    %v143 = vld [vmem:[#allocation2 + $0x20] sm:$0xff]
    %v144 = vld [vmem:[#allocation2 + $0x28] sm:$0xff]
    %v145 = vld [vmem:[#allocation2 + $0x30] sm:$0xff]
    %v146 = vld [vmem:[#allocation2 + $0x38] sm:$0xff]
    %v147 = vld [vmem:[#allocation2 + $0x40] sm:$0xff]
    %v148 = vld [vmem:[#allocation2 + $0x48] sm:$0xff]
    %v149 = vld [vmem:[#allocation2 + $0x50] sm:$0xff]
    %v150 = vld [vmem:[#allocation2 + $0x58] sm:$0xff]
    %v151 = vld [vmem:[#allocation2 + $0x60] sm:$0xff]
    %v152 = vld [vmem:[#allocation2 + $0x68] sm:$0xff]
    %v153 = vld [vmem:[#allocation2 + $0x70] sm:$0xff]
    %v154 = vld [vmem:[#allocation2 + $0x78] sm:$0xff]
    %v155 = vld [vmem:[#allocation2 + $0x80] sm:$0xff]
    %v156 = vld [vmem:[#allocation2 + $0x88] sm:$0xff]
    %v157 = vld [vmem:[#allocation2 + $0x90] sm:$0xff]
    %v158 = vld [vmem:[#allocation2 + $0x98] sm:$0xff]
    %v159 = vld [vmem:[#allocation2 + $0xa0] sm:$0xff]
    %v160 = vld [vmem:[#allocation2 + $0xa8] sm:$0xff]
    %v161 = vld [vmem:[#allocation2 + $0xb0] sm:$0xff]
    %v162 = vld [vmem:[#allocation2 + $0xb8] sm:$0xff]
    %v163 = vld [vmem:[#allocation2 + $0xc0] sm:$0xff]
    %v164 = vld [vmem:[#allocation2 + $0xc8] sm:$0xff]
    %v165 = vld [vmem:[#allocation2 + $0xd0] sm:$0xff]
    %v166 = vld [vmem:[#allocation2 + $0xd8] sm:$0xff]
    %v167 = vld [vmem:[#allocation2 + $0xe0] sm:$0xff]
    %v168 = vld [vmem:[#allocation2 + $0xe8] sm:$0xff]
    %v169 = vld [vmem:[#allocation2 + $0xf0] sm:$0xff]
    %v170 = vld [vmem:[#allocation2 + $0xf8] sm:$0xff]
    %v171 = vld [vmem:[#allocation3] sm:$0xff]
    %v172 = vld [vmem:[#allocation3 + $0x8] sm:$0xff]
    %v173 = vld [vmem:[#allocation3 + $0x10] sm:$0xff]
    %v174 = vld [vmem:[#allocation3 + $0x18] sm:$0xff]
    %v175 = vld [vmem:[#allocation3 + $0x20] sm:$0xff]
    %v176 = vld [vmem:[#allocation3 + $0x28] sm:$0xff]
    %v177 = vld [vmem:[#allocation3 + $0x30] sm:$0xff]
    %v178 = vld [vmem:[#allocation3 + $0x38] sm:$0xff]
    %v179 = vld [vmem:[#allocation3 + $0x40] sm:$0xff]
    %v180 = vld [vmem:[#allocation3 + $0x48] sm:$0xff]
    %v181 = vld [vmem:[#allocation3 + $0x50] sm:$0xff]
    %v182 = vld [vmem:[#allocation3 + $0x58] sm:$0xff]
    %v183 = vld [vmem:[#allocation3 + $0x60] sm:$0xff]
    %v184 = vld [vmem:[#allocation3 + $0x68] sm:$0xff]
    %v185 = vld [vmem:[#allocation3 + $0x70] sm:$0xff]
    %v186 = vld [vmem:[#allocation3 + $0x78] sm:$0xff]
    %v187 = vld [vmem:[#allocation6] sm:$0xff]
    %v188 = vld [vmem:[#allocation6 + $0x8] sm:$0xff]
    %v189 = vld [vmem:[#allocation6 + $0x10] sm:$0xff]
    %v190 = vld [vmem:[#allocation6 + $0x18] sm:$0xff]
    %v191 = vld [vmem:[#allocation6 + $0x20] sm:$0xff]
    %v192 = vld [vmem:[#allocation6 + $0x28] sm:$0xff]
    %v193 = vld [vmem:[#allocation6 + $0x30] sm:$0xff]
    %v194 = vld [vmem:[#allocation6 + $0x38] sm:$0xff]
    %v195 = vld [vmem:[#allocation6 + $0x40] sm:$0xff]
    %v196 = vld [vmem:[#allocation6 + $0x48] sm:$0xff]
    %v197 = vld [vmem:[#allocation6 + $0x50] sm:$0xff]
    %v198 = vld [vmem:[#allocation6 + $0x58] sm:$0xff]
    %v199 = vld [vmem:[#allocation6 + $0x60] sm:$0xff]
    %v200 = vld [vmem:[#allocation6 + $0x68] sm:$0xff]
    %v201 = vld [vmem:[#allocation6 + $0x70] sm:$0xff]
    %v202 = vld [vmem:[#allocation6 + $0x78] sm:$0xff]
    %v203 = vld [vmem:[#allocation6 + $0x80] sm:$0xff]
    %v204 = vld [vmem:[#allocation6 + $0x88] sm:$0xff]
    %v205 = vld [vmem:[#allocation6 + $0x90] sm:$0xff]
    %v206 = vld [vmem:[#allocation6 + $0x98] sm:$0xff]
    %v207 = vld [vmem:[#allocation6 + $0xa0] sm:$0xff]
    %v208 = vld [vmem:[#allocation6 + $0xa8] sm:$0xff]
    %v209 = vld [vmem:[#allocation6 + $0xb0] sm:$0xff]
    %v210 = vld [vmem:[#allocation6 + $0xb8] sm:$0xff]
    %v211 = vld [vmem:[#allocation6 + $0xc0] sm:$0xff]
    %v212 = vld [vmem:[#allocation6 + $0xc8] sm:$0xff]
    %v213 = vld [vmem:[#allocation6 + $0xd0] sm:$0xff]
    %v214 = vld [vmem:[#allocation6 + $0xd8] sm:$0xff]
    %v215 = vld [vmem:[#allocation6 + $0xe0] sm:$0xff]
    %v216 = vld [vmem:[#allocation6 + $0xe8] sm:$0xff]
    %v217 = vld [vmem:[#allocation6 + $0xf0] sm:$0xff]
    %v218 = vld [vmem:[#allocation6 + $0xf8] sm:$0xff]
    %v235 = vunpack.c.l.b16 %v171
    %v236 = vunpack.c.h.b16 %v171
    %v237 = vunpack.c.l.b16 %v172
    %v238 = vunpack.c.h.b16 %v172
    %v239 = vunpack.c.l.b16 %v173
    %v240 = vunpack.c.h.b16 %v173
    %v241 = vunpack.c.l.b16 %v174
    %v242 = vunpack.c.h.b16 %v174
    %v243 = vunpack.c.l.b16 %v175
    %v244 = vunpack.c.h.b16 %v175
    %v245 = vunpack.c.l.b16 %v176
    %v246 = vunpack.c.h.b16 %v176
    %v247 = vunpack.c.l.b16 %v177
    %v248 = vunpack.c.h.b16 %v177
    %v249 = vunpack.c.l.b16 %v178
    %v250 = vunpack.c.h.b16 %v178
    %v251 = vunpack.c.l.b16 %v179
    %v252 = vunpack.c.h.b16 %v179
    %v253 = vunpack.c.l.b16 %v180
    %v254 = vunpack.c.h.b16 %v180
    %v255 = vunpack.c.l.b16 %v181
    %v256 = vunpack.c.h.b16 %v181
    %v257 = vunpack.c.l.b16 %v182
    %v258 = vunpack.c.h.b16 %v182
    %v259 = vunpack.c.l.b16 %v183
    %v260 = vunpack.c.h.b16 %v183
    %v261 = vunpack.c.l.b16 %v184
    %v262 = vunpack.c.h.b16 %v184
    %v263 = vunpack.c.l.b16 %v185
    %v264 = vunpack.c.h.b16 %v185
    %v265 = vunpack.c.l.b16 %v186
    %v266 = vunpack.c.h.b16 %v186
    %v267 = vpack.c.b16 %v237, %v235
    %v268 = vpack.c.b16 %v238, %v236
    %v269 = vpack.c.b16 %v241, %v239
    %v270 = vpack.c.b16 %v242, %v240
    %v271 = vpack.c.b16 %v245, %v243
    %v272 = vpack.c.b16 %v246, %v244
    %v273 = vpack.c.b16 %v249, %v247
    %v274 = vpack.c.b16 %v250, %v248
    %v275 = vpack.c.b16 %v253, %v251
    %v276 = vpack.c.b16 %v254, %v252
    %v277 = vpack.c.b16 %v257, %v255
    %v278 = vpack.c.b16 %v258, %v256
    %v279 = vpack.c.b16 %v261, %v259
    %v280 = vpack.c.b16 %v262, %v260
    %v281 = vpack.c.b16 %v265, %v263
    %v282 = vpack.c.b16 %v266, %v264
    %v331 = vunpack.c.l.b16 %v187
    %v332 = vunpack.c.h.b16 %v187
    %v333 = vunpack.c.l.b16 %v188
    %v334 = vunpack.c.h.b16 %v188
    %v335 = vunpack.c.l.b16 %v189
    %v336 = vunpack.c.h.b16 %v189
    %v337 = vunpack.c.l.b16 %v190
    %v338 = vunpack.c.h.b16 %v190
    %v339 = vunpack.c.l.b16 %v191
    %v340 = vunpack.c.h.b16 %v191
    %v341 = vunpack.c.l.b16 %v192
    %v342 = vunpack.c.h.b16 %v192
    %v343 = vunpack.c.l.b16 %v193
    %v344 = vunpack.c.h.b16 %v193
    %v345 = vunpack.c.l.b16 %v194
    %v346 = vunpack.c.h.b16 %v194
    %v347 = vunpack.c.l.b16 %v195
    %v348 = vunpack.c.h.b16 %v195
    %v349 = vunpack.c.l.b16 %v196
    %v350 = vunpack.c.h.b16 %v196
    %v351 = vunpack.c.l.b16 %v197
    %v352 = vunpack.c.h.b16 %v197
    %v353 = vunpack.c.l.b16 %v198
    %v354 = vunpack.c.h.b16 %v198
    %v355 = vunpack.c.l.b16 %v199
    %v356 = vunpack.c.h.b16 %v199
    %v357 = vunpack.c.l.b16 %v200
    %v358 = vunpack.c.h.b16 %v200
    %v359 = vunpack.c.l.b16 %v201
    %v360 = vunpack.c.h.b16 %v201
    %v361 = vunpack.c.l.b16 %v202
    %v362 = vunpack.c.h.b16 %v202
    %v363 = vunpack.c.l.b16 %v203
    %v364 = vunpack.c.h.b16 %v203
    %v365 = vunpack.c.l.b16 %v204
    %v366 = vunpack.c.h.b16 %v204
    %v367 = vunpack.c.l.b16 %v205
    %v368 = vunpack.c.h.b16 %v205
    %v369 = vunpack.c.l.b16 %v206
    %v370 = vunpack.c.h.b16 %v206
    %v371 = vunpack.c.l.b16 %v207
    %v372 = vunpack.c.h.b16 %v207
    %v373 = vunpack.c.l.b16 %v208
    %v374 = vunpack.c.h.b16 %v208
    %v375 = vunpack.c.l.b16 %v209
    %v376 = vunpack.c.h.b16 %v209
    %v377 = vunpack.c.l.b16 %v210
    %v378 = vunpack.c.h.b16 %v210
    %v379 = vunpack.c.l.b16 %v211
    %v380 = vunpack.c.h.b16 %v211
    %v381 = vunpack.c.l.b16 %v212
    %v382 = vunpack.c.h.b16 %v212
    %v383 = vunpack.c.l.b16 %v213
    %v384 = vunpack.c.h.b16 %v213
    %v385 = vunpack.c.l.b16 %v214
    %v386 = vunpack.c.h.b16 %v214
    %v387 = vunpack.c.l.b16 %v215
    %v388 = vunpack.c.h.b16 %v215
    %v389 = vunpack.c.l.b16 %v216
    %v390 = vunpack.c.h.b16 %v216
    %v391 = vunpack.c.l.b16 %v217
    %v392 = vunpack.c.h.b16 %v217
    %v393 = vunpack.c.l.b16 %v218
    %v394 = vunpack.c.h.b16 %v218
    %v395 = vpack.c.b16 %v333, %v331
    %v396 = vpack.c.b16 %v334, %v332
    %v397 = vpack.c.b16 %v337, %v335
    %v398 = vpack.c.b16 %v338, %v336
    %v399 = vpack.c.b16 %v341, %v339
    %v400 = vpack.c.b16 %v342, %v340
    %v401 = vpack.c.b16 %v345, %v343
    %v402 = vpack.c.b16 %v346, %v344
    %v403 = vpack.c.b16 %v349, %v347
    %v404 = vpack.c.b16 %v350, %v348
    %v405 = vpack.c.b16 %v353, %v351
    %v406 = vpack.c.b16 %v354, %v352
    %v407 = vpack.c.b16 %v357, %v355
    %v408 = vpack.c.b16 %v358, %v356
    %v409 = vpack.c.b16 %v361, %v359
    %v410 = vpack.c.b16 %v362, %v360
    %v411 = vpack.c.b16 %v365, %v363
    %v412 = vpack.c.b16 %v366, %v364
    %v413 = vpack.c.b16 %v369, %v367
    %v414 = vpack.c.b16 %v370, %v368
    %v415 = vpack.c.b16 %v373, %v371
    %v416 = vpack.c.b16 %v374, %v372
    %v417 = vpack.c.b16 %v377, %v375
    %v418 = vpack.c.b16 %v378, %v376
    %v419 = vpack.c.b16 %v381, %v379
    %v420 = vpack.c.b16 %v382, %v380
    %v421 = vpack.c.b16 %v385, %v383
    %v422 = vpack.c.b16 %v386, %v384
    %v423 = vpack.c.b16 %v389, %v387
    %v424 = vpack.c.b16 %v390, %v388
    %v425 = vpack.c.b16 %v393, %v391
    %v426 = vpack.c.b16 %v394, %v392
    %459 = vmatpush.bf16.xpose.msra.mxu0 %v409
    %460 = vmatpush.bf16.xpose.msra.mxu0 %v407
    %461 = vmatpush.bf16.xpose.msra.mxu0 %v405
    %462 = vmatpush.bf16.xpose.msra.mxu0 %v403
    %463 = vmatpush.bf16.xpose.msra.mxu0 %v401
    %464 = vmatpush.bf16.xpose.msra.mxu0 %v399
    %465 = vmatpush.bf16.xpose.msra.mxu0 %v397
    %466 = vmatpush.bf16.xpose.msra.mxu0 %v395
    %467 = vmatmul.bf16.gmra.mxu0 %v267
    %v468 = vpop.f32.mrf.mxu0
    %v469 = vadd.f32 0.0, %v468
    %v470 = vpop.f32.mrf.mxu0
    %v471 = vadd.f32 0.0, %v470
    %472 = vmatmul.bf16.gmra.mxu0 %v269
    %v473 = vpop.f32.mrf.mxu0
    %v474 = vadd.f32 0.0, %v473
    %v475 = vpop.f32.mrf.mxu0
    %v476 = vadd.f32 0.0, %v475
    %477 = vmatmul.bf16.gmra.mxu0 %v271
    %v478 = vpop.f32.mrf.mxu0
    %v479 = vadd.f32 0.0, %v478
    %v480 = vpop.f32.mrf.mxu0
    %v481 = vadd.f32 0.0, %v480
    %482 = vmatmul.bf16.gmra.mxu0 %v273
    %v483 = vpop.f32.mrf.mxu0
    %v484 = vadd.f32 0.0, %v483
    %v485 = vpop.f32.mrf.mxu0
    %v486 = vadd.f32 0.0, %v485
    %487 = vmatmul.bf16.gmra.mxu0 %v275
    %v488 = vpop.f32.mrf.mxu0
    %v489 = vadd.f32 0.0, %v488
    %v490 = vpop.f32.mrf.mxu0
    %v491 = vadd.f32 0.0, %v490
    %492 = vmatmul.bf16.gmra.mxu0 %v277
    %v493 = vpop.f32.mrf.mxu0
    %v494 = vadd.f32 0.0, %v493
    %v495 = vpop.f32.mrf.mxu0
    %v496 = vadd.f32 0.0, %v495
    %497 = vmatmul.bf16.gmra.mxu0 %v279
    %v498 = vpop.f32.mrf.mxu0
    %v499 = vadd.f32 0.0, %v498
    %v500 = vpop.f32.mrf.mxu0
    %v501 = vadd.f32 0.0, %v500
    %502 = vmatmul.bf16.gmra.mxu0 %v281
    %v503 = vpop.f32.mrf.mxu0
    %v504 = vadd.f32 0.0, %v503
    %v505 = vpop.f32.mrf.mxu0
    %v506 = vadd.f32 0.0, %v505
    %507 = vdwg.mxu0
    %508 = vmatpush.bf16.xpose.msra.mxu0 %v410
    %509 = vmatpush.bf16.xpose.msra.mxu0 %v408
    %510 = vmatpush.bf16.xpose.msra.mxu0 %v406
    %511 = vmatpush.bf16.xpose.msra.mxu0 %v404
    %512 = vmatpush.bf16.xpose.msra.mxu0 %v402
    %513 = vmatpush.bf16.xpose.msra.mxu0 %v400
    %514 = vmatpush.bf16.xpose.msra.mxu0 %v398
    %515 = vmatpush.bf16.xpose.msra.mxu0 %v396
    %516 = vmatmul.bf16.gmra.mxu0 %v268
    %v517 = vpop.f32.mrf.mxu0
    %v518 = vadd.f32 %v469, %v517
    %v519 = vpop.f32.mrf.mxu0
    %v520 = vadd.f32 %v471, %v519
    %521 = vmatmul.bf16.gmra.mxu0 %v270
    %v522 = vpop.f32.mrf.mxu0
    %v523 = vadd.f32 %v474, %v522
    %v524 = vpop.f32.mrf.mxu0
    %v525 = vadd.f32 %v476, %v524
    %526 = vmatmul.bf16.gmra.mxu0 %v272
    %v527 = vpop.f32.mrf.mxu0
    %v528 = vadd.f32 %v479, %v527
    %v529 = vpop.f32.mrf.mxu0
    %v530 = vadd.f32 %v481, %v529
    %531 = vmatmul.bf16.gmra.mxu0 %v274
    %v532 = vpop.f32.mrf.mxu0
    %v533 = vadd.f32 %v484, %v532
    %v534 = vpop.f32.mrf.mxu0
    %v535 = vadd.f32 %v486, %v534
    %536 = vmatmul.bf16.gmra.mxu0 %v276
    %v537 = vpop.f32.mrf.mxu0
    %v538 = vadd.f32 %v489, %v537
    %v539 = vpop.f32.mrf.mxu0
    %v540 = vadd.f32 %v491, %v539
    %541 = vmatmul.bf16.gmra.mxu0 %v278
    %v542 = vpop.f32.mrf.mxu0
    %v543 = vadd.f32 %v494, %v542
    %v544 = vpop.f32.mrf.mxu0
    %v545 = vadd.f32 %v496, %v544
    %546 = vmatmul.bf16.gmra.mxu0 %v280
    %v547 = vpop.f32.mrf.mxu0
    %v548 = vadd.f32 %v499, %v547
    %v549 = vpop.f32.mrf.mxu0
    %v550 = vadd.f32 %v501, %v549
    %551 = vmatmul.bf16.gmra.mxu0 %v282
    %v552 = vpop.f32.mrf.mxu0
    %v553 = vadd.f32 %v504, %v552
    %v554 = vpop.f32.mrf.mxu0
    %v555 = vadd.f32 %v506, %v554
    %556 = vdwg.mxu0
    %557 = vmatpush.bf16.xpose.msra.mxu0 %v425
    %558 = vmatpush.bf16.xpose.msra.mxu0 %v423
    %559 = vmatpush.bf16.xpose.msra.mxu0 %v421
    %560 = vmatpush.bf16.xpose.msra.mxu0 %v419
    %561 = vmatpush.bf16.xpose.msra.mxu0 %v417
    %562 = vmatpush.bf16.xpose.msra.mxu0 %v415
    %563 = vmatpush.bf16.xpose.msra.mxu0 %v413
    %564 = vmatpush.bf16.xpose.msra.mxu0 %v411
    %565 = vmatmul.bf16.gmra.mxu0 %v267
    %v566 = vpop.f32.mrf.mxu0
    %v567 = vadd.f32 0.0, %v566
    %v568 = vpop.f32.mrf.mxu0
    %v569 = vadd.f32 0.0, %v568
    %570 = vmatmul.bf16.gmra.mxu0 %v269
    %v571 = vpop.f32.mrf.mxu0
    %v572 = vadd.f32 0.0, %v571
    %v573 = vpop.f32.mrf.mxu0
    %v574 = vadd.f32 0.0, %v573
    %575 = vmatmul.bf16.gmra.mxu0 %v271
    %v576 = vpop.f32.mrf.mxu0
    %v577 = vadd.f32 0.0, %v576
    %v578 = vpop.f32.mrf.mxu0
    %v579 = vadd.f32 0.0, %v578
    %580 = vmatmul.bf16.gmra.mxu0 %v273
    %v581 = vpop.f32.mrf.mxu0
    %v582 = vadd.f32 0.0, %v581
    %v583 = vpop.f32.mrf.mxu0
    %v584 = vadd.f32 0.0, %v583
    %585 = vmatmul.bf16.gmra.mxu0 %v275
    %v586 = vpop.f32.mrf.mxu0
    %v587 = vadd.f32 0.0, %v586
    %v588 = vpop.f32.mrf.mxu0
    %v589 = vadd.f32 0.0, %v588
    %590 = vmatmul.bf16.gmra.mxu0 %v277
    %v591 = vpop.f32.mrf.mxu0
    %v592 = vadd.f32 0.0, %v591
    %v593 = vpop.f32.mrf.mxu0
    %v594 = vadd.f32 0.0, %v593
    %595 = vmatmul.bf16.gmra.mxu0 %v279
    %v596 = vpop.f32.mrf.mxu0
    %v597 = vadd.f32 0.0, %v596
    %v598 = vpop.f32.mrf.mxu0
    %v599 = vadd.f32 0.0, %v598
    %600 = vmatmul.bf16.gmra.mxu0 %v281
    %v601 = vpop.f32.mrf.mxu0
    %v602 = vadd.f32 0.0, %v601
    %v603 = vpop.f32.mrf.mxu0
    %v604 = vadd.f32 0.0, %v603
    %605 = vdwg.mxu0
    %606 = vmatpush.bf16.xpose.msra.mxu0 %v426
    %607 = vmatpush.bf16.xpose.msra.mxu0 %v424
    %608 = vmatpush.bf16.xpose.msra.mxu0 %v422
    %609 = vmatpush.bf16.xpose.msra.mxu0 %v420
    %610 = vmatpush.bf16.xpose.msra.mxu0 %v418
    %611 = vmatpush.bf16.xpose.msra.mxu0 %v416
    %612 = vmatpush.bf16.xpose.msra.mxu0 %v414
    %613 = vmatpush.bf16.xpose.msra.mxu0 %v412
    %614 = vmatmul.bf16.gmra.mxu0 %v268
    %v615 = vpop.f32.mrf.mxu0
    %v616 = vadd.f32 %v567, %v615
    %v617 = vpop.f32.mrf.mxu0
    %v618 = vadd.f32 %v569, %v617
    %619 = vmatmul.bf16.gmra.mxu0 %v270
    %v620 = vpop.f32.mrf.mxu0
    %v621 = vadd.f32 %v572, %v620
    %v622 = vpop.f32.mrf.mxu0
    %v623 = vadd.f32 %v574, %v622
    %624 = vmatmul.bf16.gmra.mxu0 %v272
    %v625 = vpop.f32.mrf.mxu0
    %v626 = vadd.f32 %v577, %v625
    %v627 = vpop.f32.mrf.mxu0
    %v628 = vadd.f32 %v579, %v627
    %629 = vmatmul.bf16.gmra.mxu0 %v274
    %v630 = vpop.f32.mrf.mxu0
    %v631 = vadd.f32 %v582, %v630
    %v632 = vpop.f32.mrf.mxu0
    %v633 = vadd.f32 %v584, %v632
    %634 = vmatmul.bf16.gmra.mxu0 %v276
    %v635 = vpop.f32.mrf.mxu0
    %v636 = vadd.f32 %v587, %v635
    %v637 = vpop.f32.mrf.mxu0
    %v638 = vadd.f32 %v589, %v637
    %639 = vmatmul.bf16.gmra.mxu0 %v278
    %v640 = vpop.f32.mrf.mxu0
    %v641 = vadd.f32 %v592, %v640
    %v642 = vpop.f32.mrf.mxu0
    %v643 = vadd.f32 %v594, %v642
    %644 = vmatmul.bf16.gmra.mxu0 %v280
    %v645 = vpop.f32.mrf.mxu0
    %v646 = vadd.f32 %v597, %v645
    %v647 = vpop.f32.mrf.mxu0
    %v648 = vadd.f32 %v599, %v647
    %649 = vmatmul.bf16.gmra.mxu0 %v282
    %v650 = vpop.f32.mrf.mxu0
    %v651 = vadd.f32 %v602, %v650
    %v652 = vpop.f32.mrf.mxu0
    %v653 = vadd.f32 %v604, %v652
    %654 = vdwg.mxu0
    %v655 = vadd.f32 %v139, %v518
    %v656 = vadd.f32 %v140, %v616
    %v657 = vadd.f32 %v141, %v520
    %v658 = vadd.f32 %v142, %v618
    %v659 = vadd.f32 %v143, %v523
    %v660 = vadd.f32 %v144, %v621
    %v661 = vadd.f32 %v145, %v525
    %v662 = vadd.f32 %v146, %v623
    %v663 = vadd.f32 %v147, %v528
    %v664 = vadd.f32 %v148, %v626
    %v665 = vadd.f32 %v149, %v530
    %v666 = vadd.f32 %v150, %v628
    %v667 = vadd.f32 %v151, %v533
    %v668 = vadd.f32 %v152, %v631
    %v669 = vadd.f32 %v153, %v535
    %v670 = vadd.f32 %v154, %v633
    %v671 = vadd.f32 %v155, %v538
    %v672 = vadd.f32 %v156, %v636
    %v673 = vadd.f32 %v157, %v540
    %v674 = vadd.f32 %v158, %v638
    %v675 = vadd.f32 %v159, %v543
    %v676 = vadd.f32 %v160, %v641
    %v677 = vadd.f32 %v161, %v545
    %v678 = vadd.f32 %v162, %v643
    %v679 = vadd.f32 %v163, %v548
    %v680 = vadd.f32 %v164, %v646
    %v681 = vadd.f32 %v165, %v550
    %v682 = vadd.f32 %v166, %v648
    %v683 = vadd.f32 %v167, %v553
    %v684 = vadd.f32 %v168, %v651
    %v685 = vadd.f32 %v169, %v555
    %v686 = vadd.f32 %v170, %v653
    %687 = vst [vmem:[#allocation2] sm:$0xff] %v655
    %688 = vst [vmem:[#allocation2 + $0x8] sm:$0xff] %v656
    %689 = vst [vmem:[#allocation2 + $0x10] sm:$0xff] %v657
    %690 = vst [vmem:[#allocation2 + $0x18] sm:$0xff] %v658
    %691 = vst [vmem:[#allocation2 + $0x20] sm:$0xff] %v659
    %692 = vst [vmem:[#allocation2 + $0x28] sm:$0xff] %v660
    %693 = vst [vmem:[#allocation2 + $0x30] sm:$0xff] %v661
    %694 = vst [vmem:[#allocation2 + $0x38] sm:$0xff] %v662
    %695 = vst [vmem:[#allocation2 + $0x40] sm:$0xff] %v663
    %696 = vst [vmem:[#allocation2 + $0x48] sm:$0xff] %v664
    %697 = vst [vmem:[#allocation2 + $0x50] sm:$0xff] %v665
    %698 = vst [vmem:[#allocation2 + $0x58] sm:$0xff] %v666
    %699 = vst [vmem:[#allocation2 + $0x60] sm:$0xff] %v667
    %700 = vst [vmem:[#allocation2 + $0x68] sm:$0xff] %v668
    %701 = vst [vmem:[#allocation2 + $0x70] sm:$0xff] %v669
    %702 = vst [vmem:[#allocation2 + $0x78] sm:$0xff] %v670
    %703 = vst [vmem:[#allocation2 + $0x80] sm:$0xff] %v671
    %704 = vst [vmem:[#allocation2 + $0x88] sm:$0xff] %v672
    %705 = vst [vmem:[#allocation2 + $0x90] sm:$0xff] %v673
    %706 = vst [vmem:[#allocation2 + $0x98] sm:$0xff] %v674
    %707 = vst [vmem:[#allocation2 + $0xa0] sm:$0xff] %v675
    %708 = vst [vmem:[#allocation2 + $0xa8] sm:$0xff] %v676
    %709 = vst [vmem:[#allocation2 + $0xb0] sm:$0xff] %v677
    %710 = vst [vmem:[#allocation2 + $0xb8] sm:$0xff] %v678
    %711 = vst [vmem:[#allocation2 + $0xc0] sm:$0xff] %v679
    %712 = vst [vmem:[#allocation2 + $0xc8] sm:$0xff] %v680
    %713 = vst [vmem:[#allocation2 + $0xd0] sm:$0xff] %v681
    %714 = vst [vmem:[#allocation2 + $0xd8] sm:$0xff] %v682
    %715 = vst [vmem:[#allocation2 + $0xe0] sm:$0xff] %v683
    %716 = vst [vmem:[#allocation2 + $0xe8] sm:$0xff] %v684
    %717 = vst [vmem:[#allocation2 + $0xf0] sm:$0xff] %v685
    %718 = vst [vmem:[#allocation2 + $0xf8] sm:$0xff] %v686
    // Predicated region
    $region46: #{tpu_custom_call.1} parent=1 // pred_check
      %p719 = pneg %p97
    $region47: #{tpu_custom_call.1} parent=1 // pred_check_branch
      %721 = sbr.rel (%p719) target = $region49
    $region48: #{tpu_custom_call.1} parent=1 // pred_region
      %v722 = vld [vmem:[#allocation9] sm:$0xf]
      %v723 = vld [vmem:[#allocation9 + $0x4] sm:$0xf]
      %v724 = vld [vmem:[#allocation9 + $0x8] sm:$0xf]
      %v725 = vld [vmem:[#allocation9 + $0xc] sm:$0xf]
      %v726 = vld [vmem:[#allocation9 + $0x10] sm:$0xf]
      %v727 = vld [vmem:[#allocation9 + $0x14] sm:$0xf]
      %v728 = vld [vmem:[#allocation9 + $0x18] sm:$0xf]
      %v729 = vld [vmem:[#allocation9 + $0x1c] sm:$0xf]
      %v730 = vld [vmem:[#allocation9 + $0x20] sm:$0xf]
      %v731 = vld [vmem:[#allocation9 + $0x24] sm:$0xf]
      %v732 = vld [vmem:[#allocation9 + $0x28] sm:$0xf]
      %v733 = vld [vmem:[#allocation9 + $0x2c] sm:$0xf]
      %v734 = vld [vmem:[#allocation9 + $0x30] sm:$0xf]
      %v735 = vld [vmem:[#allocation9 + $0x34] sm:$0xf]
      %v736 = vld [vmem:[#allocation9 + $0x38] sm:$0xf]
      %v737 = vld [vmem:[#allocation9 + $0x3c] sm:$0xf]
      %v738 = vld [vmem:[#allocation11] sm:$0xf]
      %v739 = vld [vmem:[#allocation11 + $0x4] sm:$0xf]
      %v740 = vld [vmem:[#allocation11 + $0x8] sm:$0xf]
      %v741 = vld [vmem:[#allocation11 + $0xc] sm:$0xf]
      %v742 = vld [vmem:[#allocation11 + $0x10] sm:$0xf]
      %v743 = vld [vmem:[#allocation11 + $0x14] sm:$0xf]
      %v744 = vld [vmem:[#allocation11 + $0x18] sm:$0xf]
      %v745 = vld [vmem:[#allocation11 + $0x1c] sm:$0xf]
      %v746 = vld [vmem:[#allocation11 + $0x20] sm:$0xf]
      %v747 = vld [vmem:[#allocation11 + $0x24] sm:$0xf]
      %v748 = vld [vmem:[#allocation11 + $0x28] sm:$0xf]
      %v749 = vld [vmem:[#allocation11 + $0x2c] sm:$0xf]
      %v750 = vld [vmem:[#allocation11 + $0x30] sm:$0xf]
      %v751 = vld [vmem:[#allocation11 + $0x34] sm:$0xf]
      %v752 = vld [vmem:[#allocation11 + $0x38] sm:$0xf]
      %v753 = vld [vmem:[#allocation11 + $0x3c] sm:$0xf]
      %v754 = vld [vmem:[#allocation11 + $0x40] sm:$0xf]
      %v755 = vld [vmem:[#allocation11 + $0x44] sm:$0xf]
      %v756 = vld [vmem:[#allocation11 + $0x48] sm:$0xf]
      %v757 = vld [vmem:[#allocation11 + $0x4c] sm:$0xf]
      %v758 = vld [vmem:[#allocation11 + $0x50] sm:$0xf]
      %v759 = vld [vmem:[#allocation11 + $0x54] sm:$0xf]
      %v760 = vld [vmem:[#allocation11 + $0x58] sm:$0xf]
      %v761 = vld [vmem:[#allocation11 + $0x5c] sm:$0xf]
      %v762 = vld [vmem:[#allocation11 + $0x60] sm:$0xf]
      %v763 = vld [vmem:[#allocation11 + $0x64] sm:$0xf]
      %v764 = vld [vmem:[#allocation11 + $0x68] sm:$0xf]
      %v765 = vld [vmem:[#allocation11 + $0x6c] sm:$0xf]
      %v766 = vld [vmem:[#allocation11 + $0x70] sm:$0xf]
      %v767 = vld [vmem:[#allocation11 + $0x74] sm:$0xf]
      %v768 = vld [vmem:[#allocation11 + $0x78] sm:$0xf]
      %v769 = vld [vmem:[#allocation11 + $0x7c] sm:$0xf]
      %v786 = vunpack.c.l.b16 %v722
      %v787 = vunpack.c.l.b16 %v723
      %v788 = vunpack.c.l.b16 %v724
      %v789 = vunpack.c.l.b16 %v725
      %v790 = vunpack.c.l.b16 %v726
      %v791 = vunpack.c.l.b16 %v727
      %v792 = vunpack.c.l.b16 %v728
      %v793 = vunpack.c.l.b16 %v729
      %v794 = vunpack.c.l.b16 %v730
      %v795 = vunpack.c.l.b16 %v731
      %v796 = vunpack.c.l.b16 %v732
      %v797 = vunpack.c.l.b16 %v733
      %v798 = vunpack.c.l.b16 %v734
      %v799 = vunpack.c.l.b16 %v735
      %v800 = vunpack.c.l.b16 %v736
      %v801 = vunpack.c.l.b16 %v737
      %v802 = vpack.c.b16 %v787, %v786
      %v803 = vpack.c.b16 %v789, %v788
      %v804 = vpack.c.b16 %v791, %v790
      %v805 = vpack.c.b16 %v793, %v792
      %v806 = vpack.c.b16 %v795, %v794
      %v807 = vpack.c.b16 %v797, %v796
      %v808 = vpack.c.b16 %v799, %v798
      %v809 = vpack.c.b16 %v801, %v800
      %v850 = vunpack.c.l.b16 %v738
      %v851 = vunpack.c.l.b16 %v739
      %v852 = vunpack.c.l.b16 %v740
      %v853 = vunpack.c.l.b16 %v741
      %v854 = vunpack.c.l.b16 %v742
      %v855 = vunpack.c.l.b16 %v743
      %v856 = vunpack.c.l.b16 %v744
      %v857 = vunpack.c.l.b16 %v745
      %v858 = vunpack.c.l.b16 %v746
      %v859 = vunpack.c.l.b16 %v747
      %v860 = vunpack.c.l.b16 %v748
      %v861 = vunpack.c.l.b16 %v749
      %v862 = vunpack.c.l.b16 %v750
      %v863 = vunpack.c.l.b16 %v751
      %v864 = vunpack.c.l.b16 %v752
      %v865 = vunpack.c.l.b16 %v753
      %v866 = vunpack.c.l.b16 %v754
      %v867 = vunpack.c.l.b16 %v755
      %v868 = vunpack.c.l.b16 %v756
      %v869 = vunpack.c.l.b16 %v757
      %v870 = vunpack.c.l.b16 %v758
      %v871 = vunpack.c.l.b16 %v759
      %v872 = vunpack.c.l.b16 %v760
      %v873 = vunpack.c.l.b16 %v761
      %v874 = vunpack.c.l.b16 %v762
      %v875 = vunpack.c.l.b16 %v763
      %v876 = vunpack.c.l.b16 %v764
      %v877 = vunpack.c.l.b16 %v765
      %v878 = vunpack.c.l.b16 %v766
      %v879 = vunpack.c.l.b16 %v767
      %v880 = vunpack.c.l.b16 %v768
      %v881 = vunpack.c.l.b16 %v769
      %v882 = vpack.c.b16 %v851, %v850
      %v883 = vpack.c.b16 %v853, %v852
      %v884 = vpack.c.b16 %v855, %v854
      %v885 = vpack.c.b16 %v857, %v856
      %v886 = vpack.c.b16 %v859, %v858
      %v887 = vpack.c.b16 %v861, %v860
      %v888 = vpack.c.b16 %v863, %v862
      %v889 = vpack.c.b16 %v865, %v864
      %v890 = vpack.c.b16 %v867, %v866
      %v891 = vpack.c.b16 %v869, %v868
      %v892 = vpack.c.b16 %v871, %v870
      %v893 = vpack.c.b16 %v873, %v872
      %v894 = vpack.c.b16 %v875, %v874
      %v895 = vpack.c.b16 %v877, %v876
      %v896 = vpack.c.b16 %v879, %v878
      %v897 = vpack.c.b16 %v881, %v880
      %914 = vmatpush.bf16.xpose.msra.mxu0 %v889
      %915 = vmatpush.bf16.xpose.msra.mxu0 %v888
      %916 = vmatpush.bf16.xpose.msra.mxu0 %v887
      %917 = vmatpush.bf16.xpose.msra.mxu0 %v886
      %918 = vmatpush.bf16.xpose.msra.mxu0 %v885
      %919 = vmatpush.bf16.xpose.msra.mxu0 %v884
      %920 = vmatpush.bf16.xpose.msra.mxu0 %v883
      %921 = vmatpush.bf16.xpose.msra.mxu0 %v882
      %922 = vmatmul.bf16.gmra.mxu0 %v802
      %v923 = vpop.f32.mrf.mxu0
      %v924 = vadd.f32 0.0, %v923
      %v925 = vpop.f32.mrf.mxu0
      %v926 = vadd.f32 0.0, %v925
      %927 = vmatmul.bf16.gmra.mxu0 %v803
      %v928 = vpop.f32.mrf.mxu0
      %v929 = vadd.f32 0.0, %v928
      %v930 = vpop.f32.mrf.mxu0
      %v931 = vadd.f32 0.0, %v930
      %932 = vmatmul.bf16.gmra.mxu0 %v804
      %v933 = vpop.f32.mrf.mxu0
      %v934 = vadd.f32 0.0, %v933
      %v935 = vpop.f32.mrf.mxu0
      %v936 = vadd.f32 0.0, %v935
      %937 = vmatmul.bf16.gmra.mxu0 %v805
      %v938 = vpop.f32.mrf.mxu0
      %v939 = vadd.f32 0.0, %v938
      %v940 = vpop.f32.mrf.mxu0
      %v941 = vadd.f32 0.0, %v940
      %942 = vmatmul.bf16.gmra.mxu0 %v806
      %v943 = vpop.f32.mrf.mxu0
      %v944 = vadd.f32 0.0, %v943
      %v945 = vpop.f32.mrf.mxu0
      %v946 = vadd.f32 0.0, %v945
      %947 = vmatmul.bf16.gmra.mxu0 %v807
      %v948 = vpop.f32.mrf.mxu0
      %v949 = vadd.f32 0.0, %v948
      %v950 = vpop.f32.mrf.mxu0
      %v951 = vadd.f32 0.0, %v950
      %952 = vmatmul.bf16.gmra.mxu0 %v808
      %v953 = vpop.f32.mrf.mxu0
      %v954 = vadd.f32 0.0, %v953
      %v955 = vpop.f32.mrf.mxu0
      %v956 = vadd.f32 0.0, %v955
      %957 = vmatmul.bf16.gmra.mxu0 %v809
      %v958 = vpop.f32.mrf.mxu0
      %v959 = vadd.f32 0.0, %v958
      %v960 = vpop.f32.mrf.mxu0
      %v961 = vadd.f32 0.0, %v960
      %962 = vdwg.mxu0
      %963 = vmatpush.bf16.xpose.msra.mxu0 %v897
      %964 = vmatpush.bf16.xpose.msra.mxu0 %v896
      %965 = vmatpush.bf16.xpose.msra.mxu0 %v895
      %966 = vmatpush.bf16.xpose.msra.mxu0 %v894
      %967 = vmatpush.bf16.xpose.msra.mxu0 %v893
      %968 = vmatpush.bf16.xpose.msra.mxu0 %v892
      %969 = vmatpush.bf16.xpose.msra.mxu0 %v891
      %970 = vmatpush.bf16.xpose.msra.mxu0 %v890
      %971 = vmatmul.bf16.gmra.mxu0 %v802
      %v972 = vpop.f32.mrf.mxu0
      %v973 = vadd.f32 0.0, %v972
      %v974 = vpop.f32.mrf.mxu0
      %v975 = vadd.f32 0.0, %v974
      %976 = vmatmul.bf16.gmra.mxu0 %v803
      %v977 = vpop.f32.mrf.mxu0
      %v978 = vadd.f32 0.0, %v977
      %v979 = vpop.f32.mrf.mxu0
      %v980 = vadd.f32 0.0, %v979
      %981 = vmatmul.bf16.gmra.mxu0 %v804
      %v982 = vpop.f32.mrf.mxu0
      %v983 = vadd.f32 0.0, %v982
      %v984 = vpop.f32.mrf.mxu0
      %v985 = vadd.f32 0.0, %v984
      %986 = vmatmul.bf16.gmra.mxu0 %v805
      %v987 = vpop.f32.mrf.mxu0
      %v988 = vadd.f32 0.0, %v987
      %v989 = vpop.f32.mrf.mxu0
      %v990 = vadd.f32 0.0, %v989
      %991 = vmatmul.bf16.gmra.mxu0 %v806
      %v992 = vpop.f32.mrf.mxu0
      %v993 = vadd.f32 0.0, %v992
      %v994 = vpop.f32.mrf.mxu0
      %v995 = vadd.f32 0.0, %v994
      %996 = vmatmul.bf16.gmra.mxu0 %v807
      %v997 = vpop.f32.mrf.mxu0
      %v998 = vadd.f32 0.0, %v997
      %v999 = vpop.f32.mrf.mxu0
      %v1000 = vadd.f32 0.0, %v999
      %1001 = vmatmul.bf16.gmra.mxu0 %v808
      %v1002 = vpop.f32.mrf.mxu0
      %v1003 = vadd.f32 0.0, %v1002
      %v1004 = vpop.f32.mrf.mxu0
      %v1005 = vadd.f32 0.0, %v1004
      %1006 = vmatmul.bf16.gmra.mxu0 %v809
      %v1007 = vpop.f32.mrf.mxu0
      %v1008 = vadd.f32 0.0, %v1007
      %v1009 = vpop.f32.mrf.mxu0
      %v1010 = vadd.f32 0.0, %v1009
      %1011 = vdwg.mxu0
      %v1012 = vld [vmem:[#allocation2] sm:$0xff]
      %v1013 = vld [vmem:[#allocation2 + $0x8] sm:$0xff]
      %v1014 = vld [vmem:[#allocation2 + $0x10] sm:$0xff]
      %v1015 = vld [vmem:[#allocation2 + $0x18] sm:$0xff]
      %v1016 = vld [vmem:[#allocation2 + $0x20] sm:$0xff]
      %v1017 = vld [vmem:[#allocation2 + $0x28] sm:$0xff]
      %v1018 = vld [vmem:[#allocation2 + $0x30] sm:$0xff]
      %v1019 = vld [vmem:[#allocation2 + $0x38] sm:$0xff]
      %v1020 = vld [vmem:[#allocation2 + $0x40] sm:$0xff]
      %v1021 = vld [vmem:[#allocation2 + $0x48] sm:$0xff]
      %v1022 = vld [vmem:[#allocation2 + $0x50] sm:$0xff]
      %v1023 = vld [vmem:[#allocation2 + $0x58] sm:$0xff]
      %v1024 = vld [vmem:[#allocation2 + $0x60] sm:$0xff]
      %v1025 = vld [vmem:[#allocation2 + $0x68] sm:$0xff]
      %v1026 = vld [vmem:[#allocation2 + $0x70] sm:$0xff]
      %v1027 = vld [vmem:[#allocation2 + $0x78] sm:$0xff]
      %v1028 = vld [vmem:[#allocation2 + $0x80] sm:$0xff]
      %v1029 = vld [vmem:[#allocation2 + $0x88] sm:$0xff]
      %v1030 = vld [vmem:[#allocation2 + $0x90] sm:$0xff]
      %v1031 = vld [vmem:[#allocation2 + $0x98] sm:$0xff]
      %v1032 = vld [vmem:[#allocation2 + $0xa0] sm:$0xff]
      %v1033 = vld [vmem:[#allocation2 + $0xa8] sm:$0xff]
      %v1034 = vld [vmem:[#allocation2 + $0xb0] sm:$0xff]
      %v1035 = vld [vmem:[#allocation2 + $0xb8] sm:$0xff]
      %v1036 = vld [vmem:[#allocation2 + $0xc0] sm:$0xff]
      %v1037 = vld [vmem:[#allocation2 + $0xc8] sm:$0xff]
      %v1038 = vld [vmem:[#allocation2 + $0xd0] sm:$0xff]
      %v1039 = vld [vmem:[#allocation2 + $0xd8] sm:$0xff]
      %v1040 = vld [vmem:[#allocation2 + $0xe0] sm:$0xff]
      %v1041 = vld [vmem:[#allocation2 + $0xe8] sm:$0xff]
      %v1042 = vld [vmem:[#allocation2 + $0xf0] sm:$0xff]
      %v1043 = vld [vmem:[#allocation2 + $0xf8] sm:$0xff]
      %v1044 = vadd.f32 %v1012, %v924
      %v1045 = vadd.f32 %v1013, %v973
      %v1046 = vadd.f32 %v1014, %v926
      %v1047 = vadd.f32 %v1015, %v975
      %v1048 = vadd.f32 %v1016, %v929
      %v1049 = vadd.f32 %v1017, %v978
      %v1050 = vadd.f32 %v1018, %v931
      %v1051 = vadd.f32 %v1019, %v980
      %v1052 = vadd.f32 %v1020, %v934
      %v1053 = vadd.f32 %v1021, %v983
      %v1054 = vadd.f32 %v1022, %v936
      %v1055 = vadd.f32 %v1023, %v985
      %v1056 = vadd.f32 %v1024, %v939
      %v1057 = vadd.f32 %v1025, %v988
      %v1058 = vadd.f32 %v1026, %v941
      %v1059 = vadd.f32 %v1027, %v990
      %v1060 = vadd.f32 %v1028, %v944
      %v1061 = vadd.f32 %v1029, %v993
      %v1062 = vadd.f32 %v1030, %v946
      %v1063 = vadd.f32 %v1031, %v995
      %v1064 = vadd.f32 %v1032, %v949
      %v1065 = vadd.f32 %v1033, %v998
      %v1066 = vadd.f32 %v1034, %v951
      %v1067 = vadd.f32 %v1035, %v1000
      %v1068 = vadd.f32 %v1036, %v954
      %v1069 = vadd.f32 %v1037, %v1003
      %v1070 = vadd.f32 %v1038, %v956
      %v1071 = vadd.f32 %v1039, %v1005
      %v1072 = vadd.f32 %v1040, %v959
      %v1073 = vadd.f32 %v1041, %v1008
      %v1074 = vadd.f32 %v1042, %v961
      %v1075 = vadd.f32 %v1043, %v1010
      %1076 = vst [vmem:[#allocation12] sm:$0xff] %v1044
      %1077 = vst [vmem:[#allocation12 + $0x8] sm:$0xff] %v1045
      %1078 = vst [vmem:[#allocation12 + $0x10] sm:$0xff] %v1046
      %1079 = vst [vmem:[#allocation12 + $0x18] sm:$0xff] %v1047
      %1080 = vst [vmem:[#allocation12 + $0x20] sm:$0xff] %v1048
      %1081 = vst [vmem:[#allocation12 + $0x28] sm:$0xff] %v1049
      %1082 = vst [vmem:[#allocation12 + $0x30] sm:$0xff] %v1050
      %1083 = vst [vmem:[#allocation12 + $0x38] sm:$0xff] %v1051
      %1084 = vst [vmem:[#allocation12 + $0x40] sm:$0xff] %v1052
      %1085 = vst [vmem:[#allocation12 + $0x48] sm:$0xff] %v1053
      %1086 = vst [vmem:[#allocation12 + $0x50] sm:$0xff] %v1054
      %1087 = vst [vmem:[#allocation12 + $0x58] sm:$0xff] %v1055
      %1088 = vst [vmem:[#allocation12 + $0x60] sm:$0xff] %v1056
      %1089 = vst [vmem:[#allocation12 + $0x68] sm:$0xff] %v1057
      %1090 = vst [vmem:[#allocation12 + $0x70] sm:$0xff] %v1058
      %1091 = vst [vmem:[#allocation12 + $0x78] sm:$0xff] %v1059
      %1092 = vst [vmem:[#allocation12 + $0x80] sm:$0xff] %v1060
      %1093 = vst [vmem:[#allocation12 + $0x88] sm:$0xff] %v1061
      %1094 = vst [vmem:[#allocation12 + $0x90] sm:$0xff] %v1062
      %1095 = vst [vmem:[#allocation12 + $0x98] sm:$0xff] %v1063
      %1096 = vst [vmem:[#allocation12 + $0xa0] sm:$0xff] %v1064
      %1097 = vst [vmem:[#allocation12 + $0xa8] sm:$0xff] %v1065
      %1098 = vst [vmem:[#allocation12 + $0xb0] sm:$0xff] %v1066
      %1099 = vst [vmem:[#allocation12 + $0xb8] sm:$0xff] %v1067
      %1100 = vst [vmem:[#allocation12 + $0xc0] sm:$0xff] %v1068
      %1101 = vst [vmem:[#allocation12 + $0xc8] sm:$0xff] %v1069
      %1102 = vst [vmem:[#allocation12 + $0xd0] sm:$0xff] %v1070
      %1103 = vst [vmem:[#allocation12 + $0xd8] sm:$0xff] %v1071
      %1104 = vst [vmem:[#allocation12 + $0xe0] sm:$0xff] %v1072
      %1105 = vst [vmem:[#allocation12 + $0xe8] sm:$0xff] %v1073
      %1106 = vst [vmem:[#allocation12 + $0xf0] sm:$0xff] %v1074
      %1107 = vst [vmem:[#allocation12 + $0xf8] sm:$0xff] %v1075
    $region49: #{tpu_custom_call.1} parent=1 // pred_fallthru
      _
    // Predicated region
    $region50: #{tpu_custom_call.1} parent=1 // pred_check
      _
    $region51: #{tpu_custom_call.1} parent=1 // pred_check_branch
      %1109 = sbr.rel (0) target = $region53
    $region52: #{tpu_custom_call.1} parent=1 // pred_region
      %1111 = vsyncadd [#allocation5], 0
      %s1112 = sshll.u32 [#allocation12], 4
      %s1113 = int_to_ptr.vmem [resolvable:$true] %s1112
      %s1114 = sshll.u32 %s5, 4
      %s1115 = int_to_ptr.hbm [resolvable:$true] %s1114
      %1120 = dma.vmem_to_hbm [thread:$0]  %s1113, 4096, %s1115, [#allocation5], 256, 256, 16
    $region53: #{tpu_custom_call.1} parent=1 // pred_fallthru
      _
    // Predicated region
    $region54: #{tpu_custom_call.1} parent=1 // pred_check
      _
    $region55: #{tpu_custom_call.1} parent=1 // pred_check_branch
      %1122 = sbr.rel (0) target = $region57
    $region56: #{tpu_custom_call.1} parent=1 // pred_region
      %1124 = dma.done [#allocation5], 4096
    $region57: #{tpu_custom_call.1} parent=1 // pred_fallthru
      _
    %1125 = vsyncpa [#allocation4], 1
    %1126 = vsyncpa [#allocation7], 1
    %1127 = vsyncpa [#allocation10], 1
    %1128 = vsyncpa [#allocation5], 1

</llo_original>
